<compile_context>
chip_gen: v5e
topology: v5e:2x2
jax: 0.10.0
libtpu: 0.0.40
codegen_flags: <defaults>
</compile_context>

<pallas_src>
import math

import jax
import jax.numpy as jnp
from jax.experimental import pallas as pl
from jax.experimental.pallas import tpu as pltpu


def _mix_kernel(mix_ref, a_ref, b_ref, out_ref):
    # mix_ref: (1, 1) f32 in SMEM holding sigmoid(w), precomputed in wrapper.
    mf = mix_ref[0, 0]
    a = a_ref[...].astype(jnp.float32)
    b = b_ref[...].astype(jnp.float32)
    # a*mf + b*(1-mf) == b + (a - b) * mf  -> 2 VPU ops, hides under DMA.
    out_ref[...] = (b + (a - b) * mf).astype(out_ref.dtype)


_LANE_CANDIDATES = (1024, 512, 256, 128)
_TILE_BYTES_BUDGET = 2 << 20  # ~2 MiB per-array tile (6 live buffers ~ 12 MiB)


def _pick_lanes(total):
    """Largest lane width (multiple of 128) that divides total; else pad to 128."""
    for lanes in _LANE_CANDIDATES:
        if total % lanes == 0:
            return lanes, 0
    lanes = 128
    return lanes, (-total) % lanes


def mix_forward(w, fea1, fea2):
    """out = fea1 * sigmoid(w) + fea2 * (1 - sigmoid(w)).  fea1/fea2: NCHW."""
    assert fea1.shape == fea2.shape
    assert fea1.dtype == fea2.dtype
    orig_shape = fea1.shape
    out_dtype = fea1.dtype
    total = math.prod(orig_shape)

    # Scalar path: sigmoid once, outside the kernel.  (1, 1) for SMEM.
    mix = jax.nn.sigmoid(w.astype(jnp.float32)).reshape(1, 1)

    # Flatten to a lane-dense 2D slab: (rows, lanes), lanes % 128 == 0.
    lanes, pad = _pick_lanes(total)
    a = fea1.reshape(-1)
    b = fea2.reshape(-1)
    if pad:
        a = jnp.pad(a, (0, pad))
        b = jnp.pad(b, (0, pad))
    rows = (total + pad) // lanes
    a = a.reshape(rows, lanes)
    b = b.reshape(rows, lanes)

    itemsize = jnp.dtype(out_dtype).itemsize
    max_block_rows = max(8, (_TILE_BYTES_BUDGET // (itemsize * lanes)) // 8 * 8)

    if rows <= max_block_rows:
        block_rows = rows               # single block == full array shape
        grid = (1,)
    else:
        block_rows = max_block_rows     # multiple of 8; lanes multiple of 128
        grid = (pl.cdiv(rows, block_rows),)

    tile_spec = pl.BlockSpec((block_rows, lanes), lambda i: (i, 0))

    out2d = pl.pallas_call(
        _mix_kernel,
        out_shape=jax.ShapeDtypeStruct((rows, lanes), out_dtype),
        grid_spec=pl.GridSpec(
            grid=grid,
            in_specs=[
                pl.BlockSpec(memory_space=pltpu.MemorySpace.SMEM),  # mix scalar
                tile_spec,
                tile_spec,
            ],
            out_specs=tile_spec,
        ),
        compiler_params=pltpu.CompilerParams(
            dimension_semantics=("parallel",),
        ),
    )(mix, a, b)

    out = out2d.reshape(-1)
    if pad:
        out = out[:total]
    return out.reshape(orig_shape)


if __name__ == "__main__":
    key = jax.random.PRNGKey(0)
    k1, k2 = jax.random.split(key)

    # Parameter init matching nn.Parameter(torch.FloatTensor([m])), m = -0.8
    m = -0.8
    w = jnp.array([m], dtype=jnp.float32)

    # Small example inputs consistent with "two feature maps" (NCHW)
    N, C, H, Wd = 2, 4, 16, 16
    fea1 = jax.random.normal(k1, (N, C, H, Wd), dtype=jnp.float32)
    fea2 = jax.random.normal(k2, (N, C, H, Wd), dtype=jnp.float32)

    out = mix_forward(w, fea1, fea2)
    out = jax.block_until_ready(out)

    # Reference check (pure JAX, PyTorch formulation)
    mix_factor = jax.nn.sigmoid(w[0])
    ref = fea1 * mix_factor + fea2 * (1.0 - mix_factor)
    assert out.shape == ref.shape
    assert jnp.allclose(out, ref, atol=1e-5, rtol=1e-5), "mismatch vs reference"

    print("KERNEL_OK")
</pallas_src>

<mosaic_0001>
module attributes {stable_mosaic.version = 11 : i64} {
  func.func @_mix_kernel(%arg0: i32, %arg1: memref<1x1xf32, #tpu.memory_space<smem>>, %arg2: memref<2x1024xf32, #tpu.memory_space<vmem>>, %arg3: memref<2x1024xf32, #tpu.memory_space<vmem>>, %arg4: memref<2x1024xf32, #tpu.memory_space<vmem>>) attributes {dimension_semantics = [#tpu.dimension_semantics<parallel>], iteration_bounds = array<i64: 1>, scalar_prefetch = 0 : i64, scratch_operands = 0 : i64, tpu.core_type = #tpu.core_type<tc>, window_params = [{transform_indices = @transform_0, window_bounds = array<i64: 1, 1>}, {transform_indices = @transform_1, window_bounds = array<i64: 2, 1024>}, {transform_indices = @transform_2, window_bounds = array<i64: 2, 1024>}, {transform_indices = @transform_3, window_bounds = array<i64: 2, 1024>}]} {
    %c0 = arith.constant 0 : index
    %c0_0 = arith.constant 0 : index
    %0 = memref.load %arg1[%c0, %c0_0] : memref<1x1xf32, #tpu.memory_space<smem>>
    %c0_1 = arith.constant 0 : index
    %c0_2 = arith.constant 0 : index
    %1 = vector.load %arg2[%c0_1, %c0_2] : memref<2x1024xf32, #tpu.memory_space<vmem>>, vector<2x1024xf32>
    %c0_3 = arith.constant 0 : index
    %c0_4 = arith.constant 0 : index
    %2 = vector.load %arg3[%c0_3, %c0_4] : memref<2x1024xf32, #tpu.memory_space<vmem>>, vector<2x1024xf32>
    %3 = arith.subf %1, %2 : vector<2x1024xf32>
    %4 = vector.broadcast %0 : f32 to vector<2x1024xf32>
    %5 = arith.mulf %3, %4 : vector<2x1024xf32>
    %6 = arith.addf %2, %5 : vector<2x1024xf32>
    %c0_5 = arith.constant 0 : index
    %c0_6 = arith.constant 0 : index
    %7 = vector.load %arg4[%c0_5, %c0_6] : memref<2x1024xf32, #tpu.memory_space<vmem>>, vector<2x1024xf32>
    tpu.vector_store %arg4[%c0_5, %c0_6], %6 {strides = array<i32>} : memref<2x1024xf32, #tpu.memory_space<vmem>>, vector<2x1024xf32>,
    return
  }
  func.func @transform_0(%arg0: i32) -> (i32, i32) {
    %c0_i32 = arith.constant 0 : i32
    %c0_i32_0 = arith.constant 0 : i32
    %c0_i32_1 = arith.constant 0 : i32
    return %c0_i32, %c0_i32_0 : i32, i32
  }
  func.func @transform_1(%arg0: i32) -> (i32, i32) {
    %c0_i32 = arith.constant 0 : i32
    %c0_i32_0 = arith.constant 0 : i32
    return %arg0, %c0_i32 : i32, i32
  }
  func.func @transform_2(%arg0: i32) -> (i32, i32) {
    %c0_i32 = arith.constant 0 : i32
    %c0_i32_0 = arith.constant 0 : i32
    return %arg0, %c0_i32 : i32, i32
  }
  func.func @transform_3(%arg0: i32) -> (i32, i32) {
    %c0_i32 = arith.constant 0 : i32
    %c0_i32_0 = arith.constant 0 : i32
    return %arg0, %c0_i32 : i32, i32
  }
}

</mosaic_0001>

<llo_original>
// kernel: tpu_custom_call.1
$region0: #{tpu_custom_call.1}
  #allocation0 [shape = 'u32[]', space=smem, size = 0x4, offset = 0x4, fixed_abs, tag = 'smem constant byte address 0x4 - core index']
  #allocation1 [shape = 'u32[72,128]{1,0:T(1,128)}', space=vmem, size = 0x9000, scoped, tag = 'internal scratch']
  #allocation2 [shape = 'f32[1,1]{1,0:T(1,128)S(6)}', space=smem, size = 0x200, scoped, tag = 'scoped memory for tpu_custom_call.1']
  %s0 = inlined_call_operand.<no memory space> [shape: f32[1,1], index: 0, kind: input, shape index: {}]
  %s1 = inlined_call_operand.hbm [shape: f32[2,1024], index: 1, kind: input, shape index: {}]
  %s2 = inlined_call_operand.hbm [shape: f32[2,1024], index: 2, kind: input, shape index: {}]
  %s3 = inlined_call_operand.hbm [shape: f32[2,1024], index: 3, kind: output, shape index: {}]
  %s4 = sld [smem:[#allocation0]]
  $region30: #{tpu_custom_call.1} parent=0
    _
  %s6 = ssub.s32 1, %s4
  %s7 = scalar_select 0, %s6, %s4
  %8 = sst [smem:[#allocation2]] %s0
  $region1: #{tpu_custom_call.1} parent=0
    #allocation3 [shape = 'u8[8192]{0}', space=vmem, size = 0x2000, scoped, tag = 'input window, operand 1, single buffered']
    #allocation4 [shape = 's32[1]{0}', space=sflag, size = 0x4, scoped, tag = 'scoped memory for tpu_custom_call.1']
    #allocation5 [shape = 's32[1]{0}', space=sflag, size = 0x4, scoped, tag = 'scoped memory for tpu_custom_call.1']
    #allocation6 [shape = 'u8[8192]{0}', space=vmem, size = 0x2000, scoped, tag = 'input window, operand 2, single buffered']
    #allocation7 [shape = 's32[1]{0}', space=sflag, size = 0x4, scoped, tag = 'scoped memory for tpu_custom_call.1']
    #allocation8 [shape = 'u8[8192]{0}', space=vmem, size = 0x2000, scoped, tag = 'output window, operand 0, single buffered']
    %9 = vsyncpa [#allocation4], 0
    %10 = vsyncpa [#allocation7], 0
    %11 = vsyncpa [#allocation5], 0
    // Predicated region
    $region2: #{tpu_custom_call.1} parent=1 // pred_check
      _
    $region3: #{tpu_custom_call.1} parent=1 // pred_check_branch
      %13 = sbr.rel (0) target = $region5
    $region4: #{tpu_custom_call.1} parent=1 // pred_region
      _
    $region5: #{tpu_custom_call.1} parent=1 // pred_fallthru
      _
    // Predicated region
    $region6: #{tpu_custom_call.1} parent=1 // pred_check
      _
    $region7: #{tpu_custom_call.1} parent=1 // pred_check_branch
      %15 = sbr.rel (0) target = $region9
    $region8: #{tpu_custom_call.1} parent=1 // pred_region
      %17 = vsyncadd [#allocation4], 0
      %s19 = sshll.u32 %s1, 4
      %s20 = int_to_ptr.hbm [resolvable:$true] %s19
      %s21 = sshll.u32 [#allocation3], 4
      %s22 = int_to_ptr.vmem [resolvable:$true] %s21
      %24 = dma.hbm_to_vmem [thread:$0]  %s20, 256, %s22, [#allocation4]
    $region9: #{tpu_custom_call.1} parent=1 // pred_fallthru
      _
    // Predicated region
    $region10: #{tpu_custom_call.1} parent=1 // pred_check
      _
    $region11: #{tpu_custom_call.1} parent=1 // pred_check_branch
      %26 = sbr.rel (0) target = $region13
    $region12: #{tpu_custom_call.1} parent=1 // pred_region
      %28 = vsyncadd [#allocation7], 0
      %s30 = sshll.u32 %s2, 4
      %s31 = int_to_ptr.hbm [resolvable:$true] %s30
      %s32 = sshll.u32 [#allocation6], 4
      %s33 = int_to_ptr.vmem [resolvable:$true] %s32
      %35 = dma.hbm_to_vmem [thread:$0]  %s31, 256, %s33, [#allocation7]
    $region13: #{tpu_custom_call.1} parent=1 // pred_fallthru
      _
    // Predicated region
    $region14: #{tpu_custom_call.1} parent=1 // pred_check
      _
    $region15: #{tpu_custom_call.1} parent=1 // pred_check_branch
      %37 = sbr.rel (0) target = $region17
    $region16: #{tpu_custom_call.1} parent=1 // pred_region
      %39 = dma.done [#allocation4], 256
    $region17: #{tpu_custom_call.1} parent=1 // pred_fallthru
      _
    // Predicated region
    $region18: #{tpu_custom_call.1} parent=1 // pred_check
      _
    $region19: #{tpu_custom_call.1} parent=1 // pred_check_branch
      %41 = sbr.rel (0) target = $region21
    $region20: #{tpu_custom_call.1} parent=1 // pred_region
      %43 = dma.done [#allocation7], 256
    $region21: #{tpu_custom_call.1} parent=1 // pred_fallthru
      _
    %s44 = sld [smem:[#allocation2]]
    %v45 = vld [vmem:[#allocation3] sm:$0xff]
    %v46 = vld [vmem:[#allocation3 + $0x8] sm:$0xff]
    %v47 = vld [vmem:[#allocation6] sm:$0xff]
    %v48 = vld [vmem:[#allocation6 + $0x8] sm:$0xff]
    %v49 = vsub.f32 %v45, %v47
    %v50 = vsub.f32 %v46, %v48
    %v51 = vstv %s44
    %v52 = vmul.f32 %v49, %v51
    %v53 = vmul.f32 %v50, %v51
    %v54 = vadd.f32 %v47, %v52
    %v55 = vadd.f32 %v48, %v53
    %56 = vst [vmem:[#allocation8] sm:$0xff] %v54
    %57 = vst [vmem:[#allocation8 + $0x8] sm:$0xff] %v55
    // Predicated region
    $region22: #{tpu_custom_call.1} parent=1 // pred_check
      _
    $region23: #{tpu_custom_call.1} parent=1 // pred_check_branch
      %59 = sbr.rel (0) target = $region25
    $region24: #{tpu_custom_call.1} parent=1 // pred_region
      %61 = vsyncadd [#allocation5], 0
      %s63 = sshll.u32 [#allocation8], 4
      %s64 = int_to_ptr.vmem [resolvable:$true] %s63
      %s65 = sshll.u32 %s3, 4
      %s66 = int_to_ptr.hbm [resolvable:$true] %s65
      %68 = dma.vmem_to_hbm [thread:$0]  %s64, 256, %s66, [#allocation5]
    $region25: #{tpu_custom_call.1} parent=1 // pred_fallthru
      _
    // Predicated region
    $region26: #{tpu_custom_call.1} parent=1 // pred_check
      _
    $region27: #{tpu_custom_call.1} parent=1 // pred_check_branch
      %70 = sbr.rel (0) target = $region29
    $region28: #{tpu_custom_call.1} parent=1 // pred_region
      %72 = dma.done [#allocation5], 256
    $region29: #{tpu_custom_call.1} parent=1 // pred_fallthru
      _
    %73 = vsyncpa [#allocation4], 1
    %74 = vsyncpa [#allocation7], 1
    %75 = vsyncpa [#allocation5], 1

</llo_original>
